<compile_context>
chip_gen: v5e
topology: v5e:2x2
jax: 0.10.0
libtpu: 0.0.40
codegen_flags: <defaults>
</compile_context>

<pallas_src>
import jax
import jax.numpy as jnp
from jax.experimental import pallas as pl
from jax.experimental.pallas import tpu as pltpu


def _round_up(n, m):
    return ((n + m - 1) // m) * m


def _spatial_filter_kernel(w_ref, x_ref, o_ref):
    # w_ref: (V, C)   x_ref: (C, TT)   o_ref: (V, TT)
    o_ref[...] = jnp.dot(
        w_ref[...], x_ref[...], preferred_element_type=jnp.float32
    ).astype(o_ref.dtype)


def spatial_filtering(
    x,
    weight,
    *,
    max_tile_t=65536,
    vmem_tile_budget_bytes=12 * 1024 * 1024,
):
    """PyTorch SpatialFiltering forward.

    x:      (B, 1, C, T)
    weight: (V, 1, C, 1)   (Conv2d weight, kernel (C, 1), no bias)
    returns (B, 1, V, T)   == conv(x).permute(0, 2, 1, 3)
    """
    B, one, C, T = x.shape
    assert one == 1, "SpatialFiltering expects a single input channel"
    V = weight.shape[0]
    dtype = x.dtype
    itemsize = jnp.dtype(dtype).itemsize

    # --- layout prep (all metadata-only; no data movement in the wrapper) ----
    w2d = weight.reshape(V, C).astype(dtype)
    x3d = x.reshape(B, C, T)

    # Time tile: multiple of 128 lanes, sized so the double-buffered
    # (x-in + out) tiles stay within the VMEM budget on every generation,
    # capped at max_tile_t columns so a single tile never dominates VMEM.
    per_col_bytes = 2 * (C + V) * itemsize  # double-buffered in + out, per T column
    tt = (vmem_tile_budget_bytes // per_col_bytes) // 128 * 128
    tt = max(128, min(max_tile_t, tt))
    tt = min(tt, _round_up(T, 128))  # no point tiling past T
    if B == 1:
        # Megacore occupancy guard (v7x has 2 TCs sharing the parallel grid):
        # make sure the grid has at least 2 steps when possible.
        tt = min(tt, max(128, _round_up(pl.cdiv(T, 2), 128)))

    num_t = pl.cdiv(T, tt)
    grid = (B, num_t)

    out = pl.pallas_call(
        _spatial_filter_kernel,
        out_shape=jax.ShapeDtypeStruct((B, V, T), dtype),
        grid_spec=pltpu.PrefetchScalarGridSpec(
            num_scalar_prefetch=0,
            grid=grid,
            in_specs=[
                # weight: constant block index -> DMA'd once, stays resident
                pl.BlockSpec((V, C), lambda b, t: (0, 0)),
                # x: one (C, TT) slab per step; batch dim squeezed out of the
                # ref; C is the full array dim so no sublane padding is needed.
                pl.BlockSpec((pl.Squeezed(), C, tt), lambda b, t: (b, 0, t)),
            ],
            # output written unpadded: V full dim, partial last T tile masked
            # on store by Pallas -> no post-kernel slice pass.
            out_specs=pl.BlockSpec((pl.Squeezed(), V, tt), lambda b, t: (b, 0, t)),
        ),
        compiler_params=pltpu.CompilerParams(
            dimension_semantics=("parallel", "parallel"),
            vmem_limit_bytes=32 * 1024 * 1024,
        ),
        cost_estimate=pl.CostEstimate(
            flops=2 * B * V * C * T,
            bytes_accessed=itemsize * (B * (C + V) * T + V * C),
            transcendentals=0,
        ),
    )(w2d, x3d)

    # restore PyTorch output layout (B, 1, V, T); reshape is metadata-only
    return out.reshape(B, 1, V, T)


if __name__ == "__main__":
    key = jax.random.PRNGKey(0)
    kx, kw = jax.random.split(key)

    B, C, T = 2, 4, 16          # batch, n_channels, time (T not a multiple of 128
    V = 8                       # n_virtual_channels     -> exercises partial tile)

    x = jax.random.normal(kx, (B, 1, C, T), dtype=jnp.float32)
    # Conv2d weight shape: (out_channels=V, in_channels=1, kH=C, kW=1)
    weight = jax.random.normal(kw, (V, 1, C, 1), dtype=jnp.float32) * 0.1

    out = jax.block_until_ready(spatial_filtering(x, weight))

    # reference check (pure JAX)
    ref = jnp.einsum("vc,bct->bvt", weight.reshape(V, C), x.reshape(B, C, T))
    ref = ref.reshape(B, 1, V, T)
    assert out.shape == (B, 1, V, T)
    assert jnp.allclose(out, ref, atol=1e-5, rtol=1e-5)

    # second check at a larger, non-tile-aligned T and B == 1 (megacore guard path)
    x2 = jax.random.normal(jax.random.PRNGKey(1), (1, 1, C, 1000), dtype=jnp.float32)
    out2 = jax.block_until_ready(spatial_filtering(x2, weight))
    ref2 = jnp.einsum("vc,bct->bvt", weight.reshape(V, C), x2.reshape(1, C, 1000))
    assert jnp.allclose(out2, ref2.reshape(1, 1, V, 1000), atol=1e-5, rtol=1e-5)

    print("KERNEL_OK")
</pallas_src>

<mosaic_0001>
module attributes {stable_mosaic.version = 11 : i64} {
  func.func @_spatial_filter_kernel(%arg0: i32, %arg1: i32, %arg2: memref<8x4xf32, #tpu.memory_space<vmem>>, %arg3: memref<1x4x128xf32, #tpu.memory_space<vmem>>, %arg4: memref<1x8x128xf32, #tpu.memory_space<vmem>>) attributes {dimension_semantics = [#tpu.dimension_semantics<parallel>, #tpu.dimension_semantics<parallel>], iteration_bounds = array<i64: 2, 1>, scalar_prefetch = 0 : i64, scratch_operands = 0 : i64, tpu.core_type = #tpu.core_type<tc>, window_params = [{pipeline_mode = #tpu.pipeline_mode<synchronous>, transform_indices = @transform_0, window_bounds = array<i64: 8, 4>}, {transform_indices = @transform_1, window_bounds = array<i64: 1, 4, 128>}, {transform_indices = @transform_2, window_bounds = array<i64: 1, 8, 128>}]} {
    %c0 = arith.constant 0 : index
    %c0_0 = arith.constant 0 : index
    %0 = vector.load %arg2[%c0, %c0_0] : memref<8x4xf32, #tpu.memory_space<vmem>>, vector<8x4xf32>
    %c0_1 = arith.constant 0 : index
    %c0_2 = arith.constant 0 : index
    %c0_3 = arith.constant 0 : index
    %1 = vector.load %arg3[%c0_1, %c0_2, %c0_3] : memref<1x4x128xf32, #tpu.memory_space<vmem>>, vector<1x4x128xf32>
    %2 = vector.shape_cast %1 : vector<1x4x128xf32> to vector<4x128xf32>
    %cst = arith.constant dense<0.000000e+00> : vector<8x128xf32>
    %3 = tpu.matmul %0, %2, %cst {dimension_numbers = #tpu.dot_dimension_numbers<[1], [0], [0], [1], [0, 0, 1, 1], [], []>} : vector<8x4xf32>, vector<4x128xf32>, vector<8x128xf32> -> vector<8x128xf32>
    %c0_4 = arith.constant 0 : index
    %c0_5 = arith.constant 0 : index
    %c0_6 = arith.constant 0 : index
    %4 = vector.load %arg4[%c0_4, %c0_5, %c0_6] : memref<1x8x128xf32, #tpu.memory_space<vmem>>, vector<1x8x128xf32>
    %5 = vector.shape_cast %4 : vector<1x8x128xf32> to vector<8x128xf32>
    %6 = vector.shape_cast %3 : vector<8x128xf32> to vector<1x8x128xf32>
    tpu.vector_store %arg4[%c0_4, %c0_5, %c0_6], %6 {strides = array<i32>} : memref<1x8x128xf32, #tpu.memory_space<vmem>>, vector<1x8x128xf32>,
    return
  }
  func.func @transform_0(%arg0: i32, %arg1: i32) -> (i32, i32) {
    %c0_i32 = arith.constant 0 : i32
    %c0_i32_0 = arith.constant 0 : i32
    %c0_i32_1 = arith.constant 0 : i32
    return %c0_i32, %c0_i32_0 : i32, i32
  }
  func.func @transform_1(%arg0: i32, %arg1: i32) -> (i32, i32, i32) {
    %c0_i32 = arith.constant 0 : i32
    %c0_i32_0 = arith.constant 0 : i32
    return %arg0, %c0_i32, %arg1 : i32, i32, i32
  }
  func.func @transform_2(%arg0: i32, %arg1: i32) -> (i32, i32, i32) {
    %c0_i32 = arith.constant 0 : i32
    %c0_i32_0 = arith.constant 0 : i32
    return %arg0, %c0_i32, %arg1 : i32, i32, i32
  }
}

</mosaic_0001>

<llo_original>
// kernel: tpu_custom_call.1
$region0: #{tpu_custom_call.1}
  #allocation0 [shape = 'u32[]', space=smem, size = 0x4, offset = 0x4, fixed_abs, tag = 'smem constant byte address 0x4 - core index']
  #allocation1 [shape = 'u32[72,128]{1,0:T(1,128)}', space=vmem, size = 0x9000, scoped, tag = 'internal scratch']
  %s0 = inlined_call_operand.vmem [shape: f32[8,4], index: 0, kind: input, shape index: {}]
  %s1 = inlined_call_operand.vmem [shape: f32[2,4,16], index: 1, kind: input, shape index: {}]
  %s2 = inlined_call_operand.hbm [shape: f32[2,8,16], index: 2, kind: output, shape index: {}]
  %s3 = sld [smem:[#allocation0]]
  $region41: #{tpu_custom_call.1} parent=0
    _
  %s5 = ssub.s32 1, %s3
  %s6 = scalar_select 0, %s5, %s3
  $region1: #{tpu_custom_call.1} parent=0
    #allocation2 [shape = 'u8[8192]{0}', space=vmem, size = 0x2000, scoped, tag = 'output window, operand 0']
    #allocation3 [shape = 's32[2]{0}', space=sflag, size = 0x8, scoped, tag = 'scoped memory for tpu_custom_call.1']
    %7 = vsyncpa [#allocation3], 0
    %s8 = scalar_lea.sflag [#allocation3], 1
    %9 = vsyncpa %s8, 0
    loop: start=0, step=1, limit=4
    $region2: #{tpu_custom_call.1} parent=1 // loop_pre_header
      _
    $region3: #{tpu_custom_call.1} parent=1 // loop_header
      %s11 = sphi 0, %s15
      %p12 = scmp.ge.s32.totalorder %s11, 4
      %s18 = sphi 0, %s30
      %s19 = sphi 0, %s26
      %s20 = sphi 0, %s18
      %s21 = sphi 0, %s19
      %s22 = sphi 0, %s20
      %s23 = sphi 0, %s21
      %s31 = sphi 0, %s31
      %s33 = sphi 0, %s31
      %s34 = sphi 0, %s33
      %s48 = sphi 0, %s34
      %s56 = sphi 0, %s58
      %s59 = sphi 0, %s56
      %s60 = sphi 0, %s59
      %s76 = sphi 0, %s60
      %s84 = sphi 0, %s86
      %s87 = sphi 0, %s84
      %s88 = sphi 0, %s87
      %s104 = sphi 0, %s88
    $region4: #{tpu_custom_call.1} parent=1 // loop_header_branch
      %14 = sbr.rel (%p12) target = $region8
    $region5: #{tpu_custom_call.1} parent=1 // loop_body
      %s16 = ssub.s32 %s11, 1
      %s17 = ssub.s32 %s11, 2
      %s24 = sadd.s32 1, %s19
      %p25 = scmp.ge.s32.totalorder %s24, 1
      %s26 = scalar_select %p25, 0, %s24
      %s27 = sadd.s32 1, %s18
      %s28 = scalar_select %p25, %s27, %s18
      %p29 = scmp.ge.s32.totalorder %s28, 2
      %s30 = scalar_select %p29, 0, %s28
      %s32 = sadd.s32 %s31, 1
      %p35 = scmp.eq.s32.totalorder %s11, 1
      %p36 = scmp.ne.s32.totalorder %s31, %s33
      %p37 = scmp.eq.s32.totalorder %s11, 0
      %p38 = por %p36, %p37
      %p39 = scmp.ne.s32.totalorder %s31, %s33
      %p40 = scmp.eq.s32.totalorder %s16, 1
      %p41 = por %p39, %p40
      %p42 = scmp.ne.s32.totalorder %s33, %s34
      %p43 = scmp.eq.s32.totalorder %s16, 0
      %p44 = por %p42, %p43
      %p45 = scmp.ne.s32.totalorder %s33, %s34
      %p46 = scmp.eq.s32.totalorder %s17, 1
      %p47 = por %p45, %p46
      %p49 = scmp.ne.s32.totalorder %s34, %s48
      %p50 = scmp.eq.s32.totalorder %s17, 0
      %p51 = por %p49, %p50
      %s52 = ssub.s32 %s18, %s30
      %s53 = ssub.s32 %s19, %s26
      %s54 = sor.u32 %s52, %s53
      %p55 = scmp.eq.s32.totalorder %s54, 0
      %s57 = sadd.s32 %s56, 1
      %s58 = scalar_select %p55, %s56, %s57
      %p61 = pneg %p55
      %p62 = scmp.eq.s32.totalorder %s11, 1
      %p63 = por %p61, %p62
      %p64 = scmp.ne.s32.totalorder %s56, %s59
      %p65 = scmp.eq.s32.totalorder %s11, 0
      %p66 = por %p64, %p65
      %p67 = scmp.ne.s32.totalorder %s56, %s59
      %p68 = scmp.eq.s32.totalorder %s16, 1
      %p69 = por %p67, %p68
      %p70 = scmp.ne.s32.totalorder %s59, %s60
      %p71 = scmp.eq.s32.totalorder %s16, 0
      %p72 = por %p70, %p71
      %p73 = scmp.ne.s32.totalorder %s59, %s60
      %p74 = scmp.eq.s32.totalorder %s17, 1
      %p75 = por %p73, %p74
      %p77 = scmp.ne.s32.totalorder %s60, %s76
      %p78 = scmp.eq.s32.totalorder %s17, 0
      %p79 = por %p77, %p78
      %s80 = ssub.s32 %s18, %s30
      %s81 = ssub.s32 %s19, %s26
      %s82 = sor.u32 %s80, %s81
      %p83 = scmp.eq.s32.totalorder %s82, 0
      %s85 = sadd.s32 %s84, 1
      %s86 = scalar_select %p83, %s84, %s85
      %p89 = pneg %p83
      %p90 = scmp.eq.s32.totalorder %s11, 1
      %p91 = por %p89, %p90
      %p92 = scmp.ne.s32.totalorder %s84, %s87
      %p93 = scmp.eq.s32.totalorder %s11, 0
      %p94 = por %p92, %p93
      %p95 = scmp.ne.s32.totalorder %s84, %s87
      %p96 = scmp.eq.s32.totalorder %s16, 1
      %p97 = por %p95, %p96
      %p98 = scmp.ne.s32.totalorder %s87, %s88
      %p99 = scmp.eq.s32.totalorder %s16, 0
      %p100 = por %p98, %p99
      %p101 = scmp.ne.s32.totalorder %s87, %s88
      %p102 = scmp.eq.s32.totalorder %s17, 1
      %p103 = por %p101, %p102
      %p105 = scmp.ne.s32.totalorder %s88, %s104
      %p106 = scmp.eq.s32.totalorder %s17, 0
      %p107 = por %p105, %p106
      %p108 = scmp.le.s32.totalorder 1, %s11
      %p109 = scmp.lt.s32.totalorder %s11, 3
      %p110 = pnand %p108, %p109
      %p111 = pneg %p110
      // Predicated region
      $region9: #{tpu_custom_call.1} parent=5 // pred_check
        _
      $region10: #{tpu_custom_call.1} parent=5 // pred_check_branch
        %113 = sbr.rel (%p110) target = $region12
      $region11: #{tpu_custom_call.1} parent=5 // pred_region
        %s114 = ssub.s32 %s11, 1
        // Predicated region
        $region13: #{tpu_custom_call.1} parent=11 // pred_check
          %p115 = pneg %p44
        $region14: #{tpu_custom_call.1} parent=11 // pred_check_branch
          %117 = sbr.rel (%p115) target = $region16
        $region15: #{tpu_custom_call.1} parent=11 // pred_region
          _
        $region16: #{tpu_custom_call.1} parent=11 // pred_fallthru
          _
      $region12: #{tpu_custom_call.1} parent=5 // pred_fallthru
        _
      %p118 = scmp.lt.s32.totalorder %s11, 2
      // Predicated region
      $region17: #{tpu_custom_call.1} parent=5 // pred_check
        %p119 = pneg %p118
      $region18: #{tpu_custom_call.1} parent=5 // pred_check_branch
        %121 = sbr.rel (%p119) target = $region20
      $region19: #{tpu_custom_call.1} parent=5 // pred_region
        // Predicated region
        $region21: #{tpu_custom_call.1} parent=19 // pred_check
          %p122 = pneg %p66
        $region22: #{tpu_custom_call.1} parent=19 // pred_check_branch
          %124 = sbr.rel (%p122) target = $region24
        $region23: #{tpu_custom_call.1} parent=19 // pred_region
          %p125 = scmp.lt.s32.totalorder %s18, 1
          %s126 = scalar_select %p125, %s18, 1
          %p127 = scmp.lt.s32.totalorder %s19, 0
          %s128 = scalar_select %p127, %s19, 0
          %s129 = sadd.s32 %s128, %s126
          %s130 = smul.addr %s129, 4
          %s131 = scalar_lea.vmem %s1, %s130
        $region24: #{tpu_custom_call.1} parent=19 // pred_fallthru
          _
      $region20: #{tpu_custom_call.1} parent=5 // pred_fallthru
        _
      %p132 = scmp.le.s32.totalorder 1, %s11
      %p133 = scmp.lt.s32.totalorder %s11, 3
      %p134 = pnand %p132, %p133
      %p135 = pneg %p134
      // Predicated region
      $region25: #{tpu_custom_call.1} parent=5 // pred_check
        _
      $region26: #{tpu_custom_call.1} parent=5 // pred_check_branch
        %137 = sbr.rel (%p134) target = $region28
      $region27: #{tpu_custom_call.1} parent=5 // pred_region
        %s138 = ssub.s32 %s11, 1
        %p139 = pneg %p44
        %p140 = pneg %p41
        %p141 = scmp.lt.s32.totalorder %s20, 1
        %s142 = scalar_select %p141, %s20, 1
        %p143 = scmp.lt.s32.totalorder %s21, 0
        %s144 = scalar_select %p143, %s21, 0
        %s145 = sadd.s32 %s144, %s142
        %s146 = smul.addr %s145, 4
        %s147 = scalar_lea.vmem %s1, %s146
        %p148 = pneg %p72
        %p149 = pneg %p69
        %p150 = pneg %p100
        %p151 = pneg %p97
        %s152 = sand.u32 %s87, 1
        %s153 = scalar_lea.sflag [#allocation3], %s152
        %s154 = sand.u32 %s87, 1
        %s155 = smul.addr %s154, 8
        %s156 = scalar_lea.vmem [#allocation2], %s155
        %p157 = scmp.lt.s32.totalorder %s20, 1
        %s158 = scalar_select %p157, %s20, 1
        %p159 = scmp.lt.s32.totalorder %s21, 0
        %s160 = scalar_select %p159, %s21, 0
        %s161 = sadd.s32 %s160, %s158
        %s162 = smul.addr %s161, 4
        %s163 = scalar_lea.vmem %s1, %s162
        %v164 = vld [vmem:[%s0] sm:$0xff]
        %v165 = vld [vmem:[%s163] sm:$0xf]
        %vm166 = vcmask 31744
        %v168 = vsel %vm166, %v164, 0
        %vm170 = vcmask 1043456
        %v172 = vsel %vm170, %v165, 0
        %174 = vmatpush.msra.mxu0 0.0
        %175 = vmatpush.msra.mxu0 0.0
        %176 = vmatpush.msra.mxu0 0.0
        %177 = vmatpush.msra.mxu0 0.0
        %178 = vmatpush.msra.mxu0 0.0
        %179 = vmatpush.msra.mxu0 0.0
        %180 = vmatpush.msra.mxu0 0.0
        %181 = vmatpush.msra.mxu0 0.0
        %182 = vmatpush.msra.mxu0 0.0
        %183 = vmatpush.msra.mxu0 0.0
        %184 = vmatpush.msra.mxu0 0.0
        %185 = vmatpush.msra.mxu0 0.0
        %186 = vmatpush.msra.mxu0 0.0
        %187 = vmatpush.msra.mxu0 0.0
        %188 = vmatpush.msra.mxu0 0.0
        %189 = vmatpush.msra.mxu0 %v172
        %190 = vmatmul.f32.gmra.mxu0 %v168
        %v191 = vpop.f32.mrf.mxu0
        %v192 = vadd.f32 0.0, %v191
        %193 = vdwg.mxu0
        %194 = vst [vmem:[%s156] sm:$0xff] %v192
        %s195 = sand.u32 %s87, 1
        %s196 = scalar_lea.sflag [#allocation3], %s195
        %s197 = sand.u32 %s87, 1
        %s198 = smul.addr %s197, 8
        %s199 = scalar_lea.vmem [#allocation2], %s198
        // Predicated region
        $region29: #{tpu_custom_call.1} parent=27 // pred_check
          %p200 = pneg %p97
        $region30: #{tpu_custom_call.1} parent=27 // pred_check_branch
          %202 = sbr.rel (%p200) target = $region32
        $region31: #{tpu_custom_call.1} parent=27 // pred_region
          %204 = vsyncadd %s196, 0
          %s205 = sadd.s32 %s21, %s20
          %s206 = smul.addr %s205, 8
          %s207 = scalar_lea.hbm %s2, %s206
          %s209 = sshll.u32 %s199, 4
          %s210 = int_to_ptr.vmem [resolvable:$true] %s209
          %s211 = sshll.u32 %s207, 4
          %s212 = int_to_ptr.hbm [resolvable:$true] %s211
          %214 = dma.vmem_to_hbm [thread:$0]  %s210, 128, %s212, %s196
        $region32: #{tpu_custom_call.1} parent=27 // pred_fallthru
          _
      $region28: #{tpu_custom_call.1} parent=5 // pred_fallthru
        _
      %p215 = scmp.le.s32.totalorder 2, %s11
      // Predicated region
      $region33: #{tpu_custom_call.1} parent=5 // pred_check
        %p216 = pneg %p215
      $region34: #{tpu_custom_call.1} parent=5 // pred_check_branch
        %218 = sbr.rel (%p216) target = $region36
      $region35: #{tpu_custom_call.1} parent=5 // pred_region
        %s219 = ssub.s32 %s11, 2
        // Predicated region
        $region37: #{tpu_custom_call.1} parent=35 // pred_check
          %p220 = pneg %p103
        $region38: #{tpu_custom_call.1} parent=35 // pred_check_branch
          %222 = sbr.rel (%p220) target = $region40
        $region39: #{tpu_custom_call.1} parent=35 // pred_region
          %s223 = sand.u32 %s88, 1
          %s224 = scalar_lea.sflag [#allocation3], %s223
          %s225 = sand.u32 %s88, 1
          %s226 = smul.addr %s225, 8
          %s227 = scalar_lea.vmem [#allocation2], %s226
          %229 = dma.done %s224, 128
        $region40: #{tpu_custom_call.1} parent=35 // pred_fallthru
          _
      $region36: #{tpu_custom_call.1} parent=5 // pred_fallthru
        _
    $region6: #{tpu_custom_call.1} parent=1 // loop_footer
      %s15 = sadd.s32 1, %s11
    $region7: #{tpu_custom_call.1} parent=1 // loop_footer_branch
      %10 = sbr.rel target = $region3
    $region8: #{tpu_custom_call.1} parent=1 // loop_exit
      _
    %230 = vsyncpa [#allocation3], 1
    %s231 = scalar_lea.sflag [#allocation3], 1
    %232 = vsyncpa %s231, 1

</llo_original>
